<compile_context>
chip_gen: v7x
topology: tpu7x:2x2x1
jax: 0.10.0
libtpu: 0.0.40
codegen_flags: <defaults>
</compile_context>

<pallas_src>
import functools

import jax
import jax.numpy as jnp
from jax.experimental import pallas as pl
from jax.experimental.pallas import tpu as pltpu


def _rmsnorm_kernel(x_ref, w_ref, o_ref, *, eps: float, inv_dim: float):
    # x_ref: (tile_rows, dim_padded) block;  w_ref: (1, dim_padded) weight row.
    x = x_ref[...].astype(jnp.float32)
    # sum * (1/true_dim) instead of mean so zero-padded lanes (hidden padded
    # up to a multiple of 128) do not perturb the statistic.
    var = jnp.sum(x * x, axis=-1, keepdims=True) * inv_dim
    inv = jax.lax.rsqrt(var + eps)
    scale = 1.0 + w_ref[...].astype(jnp.float32)
    o_ref[...] = (x * inv * scale).astype(o_ref.dtype)


def _vmem_capacity_bytes() -> int:
    """Physical VMEM per TensorCore; conservative fallback if query fails."""
    try:
        return int(pltpu.get_tpu_info().vmem_capacity_bytes)
    except Exception:
        return 64 << 20  # v7x per-TC size (smallest across generations)


def _pick_tile_rows(rows: int, dim_p: int, itemsize: int,
                    target_tile_bytes: int, vmem_budget_bytes: int) -> int:
    """Row tile: big enough in *bytes* to amortize per-step overhead, small
    enough that double-buffered in/out tiles + f32 intermediates fit the
    per-generation VMEM budget."""
    # Per-row VMEM footprint:
    #   in + out tiles, double-buffered:         4 * dim_p * itemsize
    #   f32 intermediates (x_f32, product):      2 * 4 * dim_p   (single-buffered)
    bytes_per_row = 4 * dim_p * itemsize + 8 * dim_p
    max_rows = max(vmem_budget_bytes // bytes_per_row, 16)
    target_rows = max(target_tile_bytes // (dim_p * itemsize), 16)
    tr = min(target_rows, max_rows)
    # Multiple of 16 covers sublane packing for bf16 (16 rows/vreg) and f32 (8).
    tr = max((tr // 16) * 16, 16)
    if rows <= tr:
        # Ensure >= 2 grid steps (when there are enough rows) so the
        # "parallel" axis can shard across both TensorCores on v7x.
        if rows >= 32:
            half = (((rows + 1) // 2) + 15) // 16 * 16
            if half < rows:
                return half
        return rows
    return tr


def gemma_rmsnorm(x: jax.Array, weight: jax.Array, eps: float = 1e-6,
                  target_tile_bytes: int = 8 << 20) -> jax.Array:
    """Pallas implementation of GemmaRMSNorm.forward.

    x:      [..., dim] (any float dtype)
    weight: [dim]
    returns same shape/dtype as x.
    """
    orig_shape = x.shape
    dim = orig_shape[-1]
    assert weight.shape == (dim,)

    rows = 1
    for s in orig_shape[:-1]:
        rows *= s
    x2d = x.reshape(rows, dim)
    w2d = weight.reshape(1, dim)

    # Lane-dense output: pad hidden up to a multiple of 128 so stores are
    # unmasked vst (pad columns are zeros, excluded from the mean via
    # inv_dim, and sliced off below). No-op for standard Gemma dims.
    dim_p = ((dim + 127) // 128) * 128
    if dim_p != dim:
        x2d = jnp.pad(x2d, ((0, 0), (0, dim_p - dim)))
        w2d = jnp.pad(w2d, ((0, 0), (0, dim_p - dim)))

    itemsize = jnp.dtype(x.dtype).itemsize
    w_itemsize = jnp.dtype(weight.dtype).itemsize

    vmem_cap = _vmem_capacity_bytes()          # 64 MiB (v7x) / 128 MiB (v5e, v6e)
    tile_budget = vmem_cap // 2                # ~50% for in/out double-buffers
    tr = _pick_tile_rows(rows, dim_p, itemsize, target_tile_bytes, tile_budget)
    grid = (pl.cdiv(rows, tr),)

    # Scoped-VMEM limit: full working set (double-buffered in/out tiles, f32
    # intermediates, resident weight) + headroom, capped at ~75% of physical
    # VMEM so Mosaic keeps internal scratch and 2-deep pipelining.
    working = (4 * tr * dim_p * itemsize       # in + out tiles, double-buffered
               + 8 * tr * dim_p                # f32 compute intermediates
               + 2 * dim_p * w_itemsize)       # resident weight row
    vmem_limit = int(working * 1.3) + (4 << 20)
    vmem_limit = max(min(vmem_limit, (vmem_cap * 3) // 4), 32 << 20)

    cost = pl.CostEstimate(
        flops=5 * rows * dim,                  # square, reduce-add, +eps, *inv, *scale
        transcendentals=rows,                  # one rsqrt per row
        bytes_accessed=2 * rows * dim * itemsize + dim * w_itemsize,
    )

    out2d = pl.pallas_call(
        functools.partial(_rmsnorm_kernel, eps=eps, inv_dim=1.0 / dim),
        out_shape=jax.ShapeDtypeStruct((rows, dim_p), x.dtype),
        grid_spec=pltpu.PrefetchScalarGridSpec(
            num_scalar_prefetch=0,
            grid=grid,
            in_specs=[
                pl.BlockSpec((tr, dim_p), lambda i: (i, 0)),   # x tile
                pl.BlockSpec((1, dim_p), lambda i: (0, 0)),    # weight (replicated)
            ],
            out_specs=pl.BlockSpec((tr, dim_p), lambda i: (i, 0)),
        ),
        compiler_params=pltpu.CompilerParams(
            # "parallel" shards the row axis across both TCs on v7x; no-op on
            # single-TC v5e/v6e.
            dimension_semantics=("parallel",),
            vmem_limit_bytes=vmem_limit,
        ),
        cost_estimate=cost,
    )(x2d, w2d)

    if dim_p != dim:
        out2d = out2d[:, :dim]
    return out2d.reshape(orig_shape)


def _reference(x, weight, eps=1e-6):
    xf = x.astype(jnp.float32)
    out = xf * jax.lax.rsqrt(jnp.mean(xf * xf, axis=-1, keepdims=True) + eps)
    out = out * (1.0 + weight.astype(jnp.float32))
    return out.astype(x.dtype)


if __name__ == "__main__":
    key = jax.random.PRNGKey(0)
    k_x1, k_w1, k_x2, k_w2 = jax.random.split(key, 4)

    # Case 1: small, lane-aligned hidden (single grid step, no padding).
    batch, seq, hidden = 2, 8, 256
    weight1 = 0.01 * jax.random.normal(k_w1, (hidden,), dtype=jnp.float32)
    x1 = jax.random.normal(k_x1, (batch, seq, hidden), dtype=jnp.bfloat16)

    out1 = jax.block_until_ready(gemma_rmsnorm(x1, weight1, eps=1e-6))
    ref1 = _reference(x1, weight1, eps=1e-6)
    assert out1.shape == x1.shape and out1.dtype == x1.dtype
    err1 = jnp.max(jnp.abs(out1.astype(jnp.float32) - ref1.astype(jnp.float32)))
    assert float(err1) < 3e-2, f"case1 max abs error too large: {err1}"

    # Case 2: hidden not a multiple of 128 (exercises the lane-padding path)
    # and rows >= 32 (exercises the 2-step / ragged-last-block grid).
    hidden2 = 96
    weight2 = 0.02 * jax.random.normal(k_w2, (hidden2,), dtype=jnp.float32)
    x2 = jax.random.normal(k_x2, (3, 16, hidden2), dtype=jnp.bfloat16)

    out2 = jax.block_until_ready(gemma_rmsnorm(x2, weight2, eps=1e-6))
    ref2 = _reference(x2, weight2, eps=1e-6)
    assert out2.shape == x2.shape and out2.dtype == x2.dtype
    err2 = jnp.max(jnp.abs(out2.astype(jnp.float32) - ref2.astype(jnp.float32)))
    assert float(err2) < 3e-2, f"case2 max abs error too large: {err2}"

    print("KERNEL_OK")
</pallas_src>

<mosaic_0001>
module attributes {stable_mosaic.version = 11 : i64} {
  func.func @_rmsnorm_kernel(%arg0: i32, %arg1: memref<16x256xbf16, #tpu.memory_space<vmem>>, %arg2: memref<1x256xf32, #tpu.memory_space<vmem>>, %arg3: memref<16x256xbf16, #tpu.memory_space<vmem>>) attributes {dimension_semantics = [#tpu.dimension_semantics<parallel>], iteration_bounds = array<i64: 1>, scalar_prefetch = 0 : i64, scratch_operands = 0 : i64, tpu.core_type = #tpu.core_type<tc>, window_params = [{transform_indices = @transform_0, window_bounds = array<i64: 16, 256>}, {pipeline_mode = #tpu.pipeline_mode<synchronous>, transform_indices = @transform_1, window_bounds = array<i64: 1, 256>}, {transform_indices = @transform_2, window_bounds = array<i64: 16, 256>}]} {
    %c0 = arith.constant 0 : index
    %c0_0 = arith.constant 0 : index
    %0 = vector.load %arg1[%c0, %c0_0] : memref<16x256xbf16, #tpu.memory_space<vmem>>, vector<16x256xbf16>
    %1 = arith.extf %0 : vector<16x256xbf16> to vector<16x256xf32>
    %2 = arith.mulf %1, %1 : vector<16x256xf32>
    %cst = arith.constant dense<0.000000e+00> : vector<16xf32>
    %3 = vector.multi_reduction <add>, %2, %cst [1] : vector<16x256xf32> to vector<16xf32>
    %4 = vector.shape_cast %3 : vector<16xf32> to vector<16x1xf32>
    %cst_1 = arith.constant 3.906250e-03 : f32
    %5 = vector.broadcast %cst_1 : f32 to vector<16x1xf32>
    %6 = arith.mulf %4, %5 : vector<16x1xf32>
    %cst_2 = arith.constant 9.99999997E-7 : f32
    %7 = vector.broadcast %cst_2 : f32 to vector<16x1xf32>
    %8 = arith.addf %6, %7 : vector<16x1xf32>
    %9 = math.rsqrt %8 : vector<16x1xf32>
    %c0_3 = arith.constant 0 : index
    %c0_4 = arith.constant 0 : index
    %10 = vector.load %arg2[%c0_3, %c0_4] : memref<1x256xf32, #tpu.memory_space<vmem>>, vector<1x256xf32>
    %cst_5 = arith.constant 1.000000e+00 : f32
    %11 = vector.broadcast %cst_5 : f32 to vector<1x256xf32>
    %12 = arith.addf %11, %10 : vector<1x256xf32>
    %13 = vector.broadcast %9 : vector<16x1xf32> to vector<16x256xf32>
    %14 = arith.mulf %1, %13 : vector<16x256xf32>
    %15 = vector.broadcast %12 : vector<1x256xf32> to vector<16x256xf32>
    %16 = arith.mulf %14, %15 : vector<16x256xf32>
    %17 = arith.truncf %16 : vector<16x256xf32> to vector<16x256xbf16>
    %c0_6 = arith.constant 0 : index
    %c0_7 = arith.constant 0 : index
    %18 = vector.load %arg3[%c0_6, %c0_7] : memref<16x256xbf16, #tpu.memory_space<vmem>>, vector<16x256xbf16>
    tpu.vector_store %arg3[%c0_6, %c0_7], %17 {strides = array<i32>} : memref<16x256xbf16, #tpu.memory_space<vmem>>, vector<16x256xbf16>,
    return
  }
  func.func @transform_0(%arg0: i32) -> (i32, i32) {
    %c0_i32 = arith.constant 0 : i32
    %c0_i32_0 = arith.constant 0 : i32
    return %arg0, %c0_i32 : i32, i32
  }
  func.func @transform_1(%arg0: i32) -> (i32, i32) {
    %c0_i32 = arith.constant 0 : i32
    %c0_i32_0 = arith.constant 0 : i32
    %c0_i32_1 = arith.constant 0 : i32
    return %c0_i32, %c0_i32_0 : i32, i32
  }
  func.func @transform_2(%arg0: i32) -> (i32, i32) {
    %c0_i32 = arith.constant 0 : i32
    %c0_i32_0 = arith.constant 0 : i32
    return %arg0, %c0_i32 : i32, i32
  }
}

</mosaic_0001>

<llo_original>
// kernel: tpu_custom_call.1
$region0: #{tpu_custom_call.1}
  #allocation0 [shape = 'u32[]', space=smem, size = 0x4, offset = 0x4, fixed_abs, tag = 'smem constant byte address 0x4 - core index']
  #allocation1 [shape = 'u32[144,128]{1,0:T(1,128)}', space=vmem, size = 0x12000, scoped, tag = 'internal scratch']
  %s0 = inlined_call_operand.hbm [shape: bf16[16,256], index: 0, kind: input, shape index: {}]
  %s1 = inlined_call_operand.vmem [shape: f32[1,256], index: 1, kind: input, shape index: {}]
  %s2 = inlined_call_operand.hbm [shape: bf16[16,256], index: 2, kind: output, shape index: {}]
  %s3 = sld [smem:[#allocation0]]
  $region22: #{tpu_custom_call.1} parent=0
    _
  %s5 = ssub.s32 1, %s3
  %s6 = scalar_select 0, %s5, %s3
  $region1: #{tpu_custom_call.1} parent=0
    #allocation2 [shape = 'u8[8192]{0}', space=vmem, size = 0x2000, scoped, tag = 'input window, operand 0, single buffered']
    #allocation3 [shape = 's32[1]{0}', space=sflag, size = 0x4, scoped, tag = 'scoped memory for tpu_custom_call.1']
    #allocation4 [shape = 's32[1]{0}', space=sflag, size = 0x4, scoped, tag = 'scoped memory for tpu_custom_call.1']
    #allocation5 [shape = 'u8[8192]{0}', space=vmem, size = 0x2000, scoped, tag = 'output window, operand 0, single buffered']
    %7 = vsyncpa [#allocation3], 0
    %8 = vsyncpa [#allocation4], 0
    // Predicated region
    $region2: #{tpu_custom_call.1} parent=1 // pred_check
      _
    $region3: #{tpu_custom_call.1} parent=1 // pred_check_branch
      %10 = sbr.rel (0) target = $region5
    $region4: #{tpu_custom_call.1} parent=1 // pred_region
      %s12 = ssub.s32 256, 256
      %13 = vsyncadd [#allocation3], %s12
      %s14 = sshll.u32 [#allocation2], 4
      %s15 = int_to_ptr.vmem [resolvable:$true] %s14
      %20 = dma.hbm_to_vmem [thread:$0]  %s0, 256, %s15, [#allocation3], 128, 128, 8
    $region5: #{tpu_custom_call.1} parent=1 // pred_fallthru
      _
    // Predicated region
    $region6: #{tpu_custom_call.1} parent=1 // pred_check
      _
    $region7: #{tpu_custom_call.1} parent=1 // pred_check_branch
      %22 = sbr.rel (0) target = $region9
    $region8: #{tpu_custom_call.1} parent=1 // pred_region
      _
    $region9: #{tpu_custom_call.1} parent=1 // pred_fallthru
      _
    // Predicated region
    $region10: #{tpu_custom_call.1} parent=1 // pred_check
      _
    $region11: #{tpu_custom_call.1} parent=1 // pred_check_branch
      %24 = sbr.rel (0) target = $region13
    $region12: #{tpu_custom_call.1} parent=1 // pred_region
      %25 = dma.done [#allocation3], 256
    $region13: #{tpu_custom_call.1} parent=1 // pred_fallthru
      _
    %v26 = vld [vmem:[#allocation2] sm:$0xff]
    %v27 = vld [vmem:[#allocation2 + $0x8] sm:$0xff]
    %v28 = vunpack.c.l.bf16 %v26
    %v29 = vunpack.c.h.bf16 %v26
    %v30 = vunpack.c.l.bf16 %v27
    %v31 = vunpack.c.h.bf16 %v27
    %v32 = vmul.f32 %v28, %v28
    %v33 = vmul.f32 %v29, %v29
    %v34 = vmul.f32 %v30, %v30
    %v35 = vmul.f32 %v31, %v31
    %v36 = vadd.f32 %v32, %v33
    %37 = vadd.xlane.f32.xlu0 %v36
    %v38 = vpop.xlane.xlu0 %37
    %v39 = vadd.f32 %v34, %v35
    %40 = vadd.xlane.f32.xlu0 %v39
    %v41 = vpop.xlane.xlu0 %40
    %v42 = vmul.f32 %v38, 0.00390625
    %v43 = vmul.f32 %v41, 0.00390625
    %v44 = vadd.f32 %v42, 1e-06
    %v45 = vadd.f32 %v43, 1e-06
    %v46 = vrsqrt.pop %v44
    %v47 = vrsqrt.pop %v45
    %v48 = vld [vmem:[%s1] sm:$0x3]
    %v49 = vadd.f32 %v48, 1.0
    %v50 = vmul.f32 %v28, %v46
    %v51 = vmul.f32 %v29, %v46
    %v52 = vmul.f32 %v30, %v47
    %v53 = vmul.f32 %v31, %v47
    %v55 = vlaneseq
    %v56 = vshrl.u32 %v55, 7
    %v57 = vsub.s32 0, %v56
    %v58 = vrot.slane %v49, %v57
    %v59 = vlaneseq
    %v60 = vshrl.u32 %v59, 7
    %v61 = vsub.s32 1, %v60
    %v62 = vrot.slane %v49, %v61
    %v65 = vmul.f32 %v50, %v58
    %v66 = vmul.f32 %v51, %v62
    %v67 = vmul.f32 %v52, %v58
    %v68 = vmul.f32 %v53, %v62
    %v69 = vpack.c.bf16 %v67, %v65
    %v70 = vpack.c.bf16 %v68, %v66
    %v73 = vunpack.c.l.b16 %v69
    %v74 = vunpack.c.l.b16 %v70
    %v75 = vunpack.c.h.b16 %v69
    %v76 = vunpack.c.h.b16 %v70
    %v77 = vpack.c.b16 %v74, %v73
    %v78 = vpack.c.b16 %v76, %v75
    %81 = vst [vmem:[#allocation5] sm:$0xff] %v77
    %82 = vst [vmem:[#allocation5 + $0x8] sm:$0xff] %v78
    // Predicated region
    $region14: #{tpu_custom_call.1} parent=1 // pred_check
      _
    $region15: #{tpu_custom_call.1} parent=1 // pred_check_branch
      %84 = sbr.rel (0) target = $region17
    $region16: #{tpu_custom_call.1} parent=1 // pred_region
      %s86 = ssub.s32 256, 256
      %87 = vsyncadd [#allocation4], %s86
      %s88 = sshll.u32 [#allocation5], 4
      %s89 = int_to_ptr.vmem [resolvable:$true] %s88
      %94 = dma.vmem_to_hbm [thread:$0]  %s89, 256, %s2, [#allocation4], 128, 128, 8
    $region17: #{tpu_custom_call.1} parent=1 // pred_fallthru
      _
    // Predicated region
    $region18: #{tpu_custom_call.1} parent=1 // pred_check
      _
    $region19: #{tpu_custom_call.1} parent=1 // pred_check_branch
      %96 = sbr.rel (0) target = $region21
    $region20: #{tpu_custom_call.1} parent=1 // pred_region
      %97 = dma.done [#allocation4], 256
    $region21: #{tpu_custom_call.1} parent=1 // pred_fallthru
      _
    %98 = vsyncpa [#allocation3], 1
    %99 = vsyncpa [#allocation4], 1

</llo_original>
